<compile_context>
chip_gen: v7x
topology: tpu7x:2x2x1
jax: 0.10.0
libtpu: 0.0.40
codegen_flags: <defaults>
</compile_context>

<pallas_src>
import jax
import jax.numpy as jnp
from jax.experimental import pallas as pl
from jax.experimental.pallas import tpu as pltpu


def _feature_head_kernel(x_ref, w_ref, b_ref, o_ref):
    # x_ref: (TM, Dp)  activation row tile (streamed, double-buffered)
    # w_ref: (Dp, Dp)  collapsed Linear1+BN1+Linear2+BN2 weight (resident, 1 buffer)
    # b_ref: (1, Dp)   collapsed bias, f32 (resident, 1 buffer)
    # o_ref: (TM, Dp)  output row tile
    y = jnp.dot(x_ref[...], w_ref[...], preferred_element_type=jnp.float32)
    y = y + b_ref[...]
    o_ref[...] = y.astype(o_ref.dtype)


def _round_up(x, m):
    return ((x + m - 1) // m) * m


def feature_interpreter_forward(
    inputs,
    w1, bn1_gamma, bn1_beta, bn1_mean, bn1_var,
    w2, bn2_gamma, bn2_beta, bn2_mean, bn2_var,
    *,
    eps=2e-5,
    block_rows=512,
    matmul_dtype=None,
):
    """JAX/Pallas equivalent of FeatureInterpreter.forward (inference mode).

    inputs: dict with 'decoder_output' of shape (S, B, C), S * C == hidden_dim.
    w1, w2: (D, D) torch nn.Linear weights (out_features x in_features), bias=False.
    bn*_{gamma,beta,mean,var}: (D,) BatchNorm1d affine params and running stats.
    Returns the same dict with 'head_output' of shape (B, D).
    """
    x = inputs["decoder_output"]                         # (S, B, C)
    S, B, C = x.shape
    D = S * C
    f32 = jnp.float32

    # permute(1, 2, 0) -> (B, C, S); flatten(1) -> (B, D).  Tiny: B*D elements.
    x_flat = jnp.transpose(x, (1, 2, 0)).reshape(B, D)

    # Matmul dtype: default = input dtype (exactness for the f32 demo); use
    # jnp.bfloat16 in production for full MXU rate + halved weight traffic.
    if matmul_dtype is None:
        matmul_dtype = x.dtype

    # Fold each Linear(no bias) + inference BatchNorm into one affine, in f32.
    def fold(w, gamma, beta, mean, var):
        scale = gamma.astype(f32) / jnp.sqrt(var.astype(f32) + eps)    # (D,)
        w_f = w.T.astype(f32) * scale[None, :]                          # (D_in, D_out)
        b_f = beta.astype(f32) - mean.astype(f32) * scale               # (D,)
        return w_f, b_f

    w1_f, b1_f = fold(w1, bn1_gamma, bn1_beta, bn1_mean, bn1_var)
    w2_f, b2_f = fold(w2, bn2_gamma, bn2_beta, bn2_mean, bn2_var)

    # Collapse the two back-to-back affine stages into one (exact algebra):
    #   y = x @ (W1f @ W2f) + (b1f @ W2f + b2f)
    w_all = w1_f @ w2_f                                                 # (D, D) f32
    b_all = b1_f @ w2_f + b2_f                                          # (D,)   f32

    # Pad the feature (lane) dim to a multiple of 128 -> lane-dense stores,
    # legal (8,128)-aligned blocks.  Zero-padded weight rows make the padded
    # input columns contribute nothing.
    Dp = max(_round_up(D, 128), 128)
    if Dp != D:
        x_flat = jnp.pad(x_flat, ((0, 0), (0, Dp - D)))
        w_all = jnp.pad(w_all, ((0, Dp - D), (0, Dp - D)))
        b_all = jnp.pad(b_all, ((0, Dp - D),))

    x_flat = x_flat.astype(matmul_dtype)
    w_all = w_all.astype(matmul_dtype)
    b_all = b_all.reshape(1, Dp).astype(f32)

    # Row tiling: full-array block for small B, large pipelined tiles otherwise.
    if B <= block_rows:
        tm = B                       # block == full dim -> always legal
    else:
        tm = block_rows              # multiple of 8; partial last block is masked
    grid_m = pl.cdiv(B, tm)

    out_dtype = x.dtype
    itemsize = jnp.dtype(matmul_dtype).itemsize
    out_itemsize = jnp.dtype(out_dtype).itemsize

    # Explicit VMEM budget: single-buffered weight/bias + double-buffered tiles.
    vmem_bytes = (
        Dp * Dp * itemsize                  # collapsed weight (Buffered(1))
        + Dp * 4                            # collapsed bias (f32)
        + 2 * tm * Dp * itemsize            # x row tile, double-buffered
        + 2 * tm * Dp * out_itemsize        # out row tile, double-buffered
    )
    vmem_limit = min(int(vmem_bytes * 1.5) + (4 << 20), 128 << 20)

    cost = pl.CostEstimate(
        flops=2 * B * Dp * Dp,
        transcendentals=0,
        bytes_accessed=(B * Dp * itemsize           # x
                        + Dp * Dp * itemsize        # W
                        + Dp * 4                    # b
                        + B * Dp * out_itemsize),   # out
    )

    out = pl.pallas_call(
        _feature_head_kernel,
        out_shape=jax.ShapeDtypeStruct((B, Dp), out_dtype),
        grid=(grid_m,),
        in_specs=[
            pl.BlockSpec((tm, Dp), lambda i: (i, 0)),               # x tile (streamed)
            pl.BlockSpec((Dp, Dp), lambda i: (0, 0),
                         pipeline_mode=pl.Buffered(buffer_count=1)),  # W (resident)
            pl.BlockSpec((1, Dp), lambda i: (0, 0),
                         pipeline_mode=pl.Buffered(buffer_count=1)),  # b (resident)
        ],
        out_specs=pl.BlockSpec((tm, Dp), lambda i: (i, 0)),
        compiler_params=pltpu.CompilerParams(
            dimension_semantics=("parallel",),
            vmem_limit_bytes=vmem_limit,
        ),
        cost_estimate=cost,
    )(x_flat, w_all, b_all)

    if Dp != D:
        out = out[:, :D]

    inputs["head_output"] = out                          # (B, D)
    return inputs


if __name__ == "__main__":
    # Small shapes consistent with the module: seq=8, channels=4 -> hidden_dim=32, batch=2.
    seq, batch, channels = 8, 2, 4
    hidden_dim = seq * channels                          # 32
    eps = 2e-5

    key = jax.random.PRNGKey(0)
    keys = jax.random.split(key, 11)

    decoder_output = jax.random.normal(keys[0], (seq, batch, channels), jnp.float32)

    bound = 1.0 / (hidden_dim ** 0.5)
    w1 = jax.random.uniform(keys[1], (hidden_dim, hidden_dim), jnp.float32, -bound, bound)
    w2 = jax.random.uniform(keys[2], (hidden_dim, hidden_dim), jnp.float32, -bound, bound)

    bn1_gamma = jax.random.uniform(keys[3], (hidden_dim,), jnp.float32, 0.5, 1.5)
    bn1_beta = jax.random.uniform(keys[4], (hidden_dim,), jnp.float32, -0.5, 0.5)
    bn1_mean = jax.random.uniform(keys[5], (hidden_dim,), jnp.float32, -0.5, 0.5)
    bn1_var = jax.random.uniform(keys[6], (hidden_dim,), jnp.float32, 0.5, 1.5)

    bn2_gamma = jax.random.uniform(keys[7], (hidden_dim,), jnp.float32, 0.5, 1.5)
    bn2_beta = jax.random.uniform(keys[8], (hidden_dim,), jnp.float32, -0.5, 0.5)
    bn2_mean = jax.random.uniform(keys[9], (hidden_dim,), jnp.float32, -0.5, 0.5)
    bn2_var = jax.random.uniform(keys[10], (hidden_dim,), jnp.float32, 0.5, 1.5)

    inputs = {"decoder_output": decoder_output}
    out = feature_interpreter_forward(
        inputs,
        w1, bn1_gamma, bn1_beta, bn1_mean, bn1_var,
        w2, bn2_gamma, bn2_beta, bn2_mean, bn2_var,
        eps=eps,
    )
    head = jax.block_until_ready(out["head_output"])

    # Plain-JAX reference (permute/flatten + Linear + BN + Linear + BN, eval mode).
    xr = jnp.transpose(decoder_output, (1, 2, 0)).reshape(batch, hidden_dim)
    h = xr @ w1.T
    h = (h - bn1_mean) / jnp.sqrt(bn1_var + eps) * bn1_gamma + bn1_beta
    y = h @ w2.T
    y = (y - bn2_mean) / jnp.sqrt(bn2_var + eps) * bn2_gamma + bn2_beta

    assert head.shape == (batch, hidden_dim)
    # Affine collapse changes rounding order vs. the two-matmul reference;
    # use a slightly loosened (still tight for f32) tolerance.
    assert jnp.allclose(head, y, atol=2e-4, rtol=2e-4), float(jnp.max(jnp.abs(head - y)))

    print("KERNEL_OK")
</pallas_src>

<mosaic_0001>
module attributes {stable_mosaic.version = 11 : i64} {
  func.func @_feature_head_kernel(%arg0: i32, %arg1: memref<2x128xf32, #tpu.memory_space<vmem>>, %arg2: memref<128x128xf32, #tpu.memory_space<vmem>>, %arg3: memref<1x128xf32, #tpu.memory_space<vmem>>, %arg4: memref<2x128xf32, #tpu.memory_space<vmem>>) attributes {dimension_semantics = [#tpu.dimension_semantics<parallel>], iteration_bounds = array<i64: 1>, scalar_prefetch = 0 : i64, scratch_operands = 0 : i64, tpu.core_type = #tpu.core_type<tc>, window_params = [{transform_indices = @transform_0, window_bounds = array<i64: 2, 128>}, {pipeline_mode = #tpu.pipeline_mode<synchronous>, transform_indices = @transform_1, window_bounds = array<i64: 128, 128>}, {pipeline_mode = #tpu.pipeline_mode<synchronous>, transform_indices = @transform_2, window_bounds = array<i64: 1, 128>}, {transform_indices = @transform_3, window_bounds = array<i64: 2, 128>}]} {
    %c0 = arith.constant 0 : index
    %c0_0 = arith.constant 0 : index
    %0 = vector.load %arg1[%c0, %c0_0] : memref<2x128xf32, #tpu.memory_space<vmem>>, vector<2x128xf32>
    %c0_1 = arith.constant 0 : index
    %c0_2 = arith.constant 0 : index
    %1 = vector.load %arg2[%c0_1, %c0_2] : memref<128x128xf32, #tpu.memory_space<vmem>>, vector<128x128xf32>
    %cst = arith.constant dense<0.000000e+00> : vector<2x128xf32>
    %2 = tpu.matmul %0, %1, %cst {dimension_numbers = #tpu.dot_dimension_numbers<[1], [0], [0], [1], [0, 0, 1, 1], [], []>} : vector<2x128xf32>, vector<128x128xf32>, vector<2x128xf32> -> vector<2x128xf32>
    %c0_3 = arith.constant 0 : index
    %c0_4 = arith.constant 0 : index
    %3 = vector.load %arg3[%c0_3, %c0_4] : memref<1x128xf32, #tpu.memory_space<vmem>>, vector<1x128xf32>
    %4 = vector.broadcast %3 : vector<1x128xf32> to vector<2x128xf32>
    %5 = arith.addf %2, %4 : vector<2x128xf32>
    %c0_5 = arith.constant 0 : index
    %c0_6 = arith.constant 0 : index
    %6 = vector.load %arg4[%c0_5, %c0_6] : memref<2x128xf32, #tpu.memory_space<vmem>>, vector<2x128xf32>
    tpu.vector_store %arg4[%c0_5, %c0_6], %5 {strides = array<i32>} : memref<2x128xf32, #tpu.memory_space<vmem>>, vector<2x128xf32>,
    return
  }
  func.func @transform_0(%arg0: i32) -> (i32, i32) {
    %c0_i32 = arith.constant 0 : i32
    %c0_i32_0 = arith.constant 0 : i32
    return %arg0, %c0_i32 : i32, i32
  }
  func.func @transform_1(%arg0: i32) -> (i32, i32) {
    %c0_i32 = arith.constant 0 : i32
    %c0_i32_0 = arith.constant 0 : i32
    %c0_i32_1 = arith.constant 0 : i32
    return %c0_i32, %c0_i32_0 : i32, i32
  }
  func.func @transform_2(%arg0: i32) -> (i32, i32) {
    %c0_i32 = arith.constant 0 : i32
    %c0_i32_0 = arith.constant 0 : i32
    %c0_i32_1 = arith.constant 0 : i32
    return %c0_i32, %c0_i32_0 : i32, i32
  }
  func.func @transform_3(%arg0: i32) -> (i32, i32) {
    %c0_i32 = arith.constant 0 : i32
    %c0_i32_0 = arith.constant 0 : i32
    return %arg0, %c0_i32 : i32, i32
  }
}

</mosaic_0001>

<llo_original>
// kernel: tpu_custom_call.1
$region0: #{tpu_custom_call.1}
  #allocation0 [shape = 'u32[]', space=smem, size = 0x4, offset = 0x4, fixed_abs, tag = 'smem constant byte address 0x4 - core index']
  #allocation1 [shape = 'u32[144,128]{1,0:T(1,128)}', space=vmem, size = 0x12000, scoped, tag = 'internal scratch']
  %s0 = inlined_call_operand.hbm [shape: f32[2,128], index: 0, kind: input, shape index: {}]
  %s1 = inlined_call_operand.hbm [shape: f32[128,128], index: 1, kind: input, shape index: {}]
  %s2 = inlined_call_operand.vmem [shape: f32[1,128], index: 2, kind: input, shape index: {}]
  %s3 = inlined_call_operand.hbm [shape: f32[2,128], index: 3, kind: output, shape index: {}]
  %s4 = sld [smem:[#allocation0]]
  $region30: #{tpu_custom_call.1} parent=0
    _
  %s6 = ssub.s32 1, %s4
  %s7 = scalar_select 0, %s6, %s4
  $region1: #{tpu_custom_call.1} parent=0
    #allocation2 [shape = 'u8[1024]{0}', space=vmem, size = 0x400, scoped, tag = 'input window, operand 0, single buffered']
    #allocation3 [shape = 's32[1]{0}', space=sflag, size = 0x4, scoped, tag = 'scoped memory for tpu_custom_call.1']
    #allocation4 [shape = 's32[1]{0}', space=sflag, size = 0x4, scoped, tag = 'scoped memory for tpu_custom_call.1']
    #allocation5 [shape = 'u8[65536]{0}', space=vmem, size = 0x10000, scoped, tag = 'input window, operand 1, single buffered']
    #allocation6 [shape = 's32[1]{0}', space=sflag, size = 0x4, scoped, tag = 'scoped memory for tpu_custom_call.1']
    #allocation7 [shape = 'u8[1024]{0}', space=vmem, size = 0x400, scoped, tag = 'output window, operand 0, single buffered']
    %8 = vsyncpa [#allocation3], 0
    %9 = vsyncpa [#allocation6], 0
    %10 = vsyncpa [#allocation4], 0
    // Predicated region
    $region2: #{tpu_custom_call.1} parent=1 // pred_check
      _
    $region3: #{tpu_custom_call.1} parent=1 // pred_check_branch
      %12 = sbr.rel (0) target = $region5
    $region4: #{tpu_custom_call.1} parent=1 // pred_region
      %s14 = ssub.s32 32, 32
      %15 = vsyncadd [#allocation3], %s14
      %s17 = sshll.u32 [#allocation2], 4
      %s18 = int_to_ptr.vmem [resolvable:$true] %s17
      %20 = dma.hbm_to_vmem [thread:$0]  %s0, 32, %s18, [#allocation3]
    $region5: #{tpu_custom_call.1} parent=1 // pred_fallthru
      _
    // Predicated region
    $region6: #{tpu_custom_call.1} parent=1 // pred_check
      _
    $region7: #{tpu_custom_call.1} parent=1 // pred_check_branch
      %22 = sbr.rel (0) target = $region9
    $region8: #{tpu_custom_call.1} parent=1 // pred_region
      %s24 = ssub.s32 2048, 2048
      %25 = vsyncadd [#allocation6], %s24
      %s26 = sshll.u32 [#allocation5], 4
      %s27 = int_to_ptr.vmem [resolvable:$true] %s26
      %32 = dma.hbm_to_vmem [thread:$0]  %s1, 2048, %s27, [#allocation6], 128, 128, 8
    $region9: #{tpu_custom_call.1} parent=1 // pred_fallthru
      _
    // Predicated region
    $region10: #{tpu_custom_call.1} parent=1 // pred_check
      _
    $region11: #{tpu_custom_call.1} parent=1 // pred_check_branch
      %34 = sbr.rel (0) target = $region13
    $region12: #{tpu_custom_call.1} parent=1 // pred_region
      _
    $region13: #{tpu_custom_call.1} parent=1 // pred_fallthru
      _
    // Predicated region
    $region14: #{tpu_custom_call.1} parent=1 // pred_check
      _
    $region15: #{tpu_custom_call.1} parent=1 // pred_check_branch
      %36 = sbr.rel (0) target = $region17
    $region16: #{tpu_custom_call.1} parent=1 // pred_region
      %37 = dma.done [#allocation3], 32
    $region17: #{tpu_custom_call.1} parent=1 // pred_fallthru
      _
    // Predicated region
    $region18: #{tpu_custom_call.1} parent=1 // pred_check
      _
    $region19: #{tpu_custom_call.1} parent=1 // pred_check_branch
      %39 = sbr.rel (0) target = $region21
    $region20: #{tpu_custom_call.1} parent=1 // pred_region
      %40 = dma.done [#allocation6], 2048
    $region21: #{tpu_custom_call.1} parent=1 // pred_fallthru
      _
    %v41 = vld [vmem:[#allocation2] sm:$0x3]
    %v42 = vld [vmem:[#allocation5] sm:$0xff]
    %v43 = vld [vmem:[#allocation5 + $0x8] sm:$0xff]
    %v44 = vld [vmem:[#allocation5 + $0x10] sm:$0xff]
    %v45 = vld [vmem:[#allocation5 + $0x18] sm:$0xff]
    %v46 = vld [vmem:[#allocation5 + $0x20] sm:$0xff]
    %v47 = vld [vmem:[#allocation5 + $0x28] sm:$0xff]
    %v48 = vld [vmem:[#allocation5 + $0x30] sm:$0xff]
    %v49 = vld [vmem:[#allocation5 + $0x38] sm:$0xff]
    %v50 = vld [vmem:[#allocation5 + $0x40] sm:$0xff]
    %v51 = vld [vmem:[#allocation5 + $0x48] sm:$0xff]
    %v52 = vld [vmem:[#allocation5 + $0x50] sm:$0xff]
    %v53 = vld [vmem:[#allocation5 + $0x58] sm:$0xff]
    %v54 = vld [vmem:[#allocation5 + $0x60] sm:$0xff]
    %v55 = vld [vmem:[#allocation5 + $0x68] sm:$0xff]
    %v56 = vld [vmem:[#allocation5 + $0x70] sm:$0xff]
    %v57 = vld [vmem:[#allocation5 + $0x78] sm:$0xff]
    %v58 = vld [vmem:[%s2] sm:$0x1]
    %v60 = vlaneseq
    %v61 = vshrl.u32 %v60, 7
    %v62 = vsub.s32 0, %v61
    %v63 = vrot.slane %v58, %v62
    %65 = vmatprep.subr.mxu0 0.0
    %66 = vmatpush1.msra.mxu0 %v42
    %67 = vmatprep.subr.mxu0 0.0
    %68 = vmatpush1.msra.mxu0 %v43
    %69 = vmatprep.subr.mxu0 0.0
    %70 = vmatpush1.msra.mxu0 %v44
    %71 = vmatprep.subr.mxu0 0.0
    %72 = vmatpush1.msra.mxu0 %v45
    %73 = vmatprep.subr.mxu0 0.0
    %74 = vmatpush1.msra.mxu0 %v46
    %75 = vmatprep.subr.mxu0 0.0
    %76 = vmatpush1.msra.mxu0 %v47
    %77 = vmatprep.subr.mxu0 0.0
    %78 = vmatpush1.msra.mxu0 %v48
    %79 = vmatprep.subr.mxu0 0.0
    %80 = vmatpush1.msra.mxu0 %v49
    %81 = vmatprep.subr.mxu0 0.0
    %82 = vmatpush1.msra.mxu0 %v50
    %83 = vmatprep.subr.mxu0 0.0
    %84 = vmatpush1.msra.mxu0 %v51
    %85 = vmatprep.subr.mxu0 0.0
    %86 = vmatpush1.msra.mxu0 %v52
    %87 = vmatprep.subr.mxu0 0.0
    %88 = vmatpush1.msra.mxu0 %v53
    %89 = vmatprep.subr.mxu0 0.0
    %90 = vmatpush1.msra.mxu0 %v54
    %91 = vmatprep.subr.mxu0 0.0
    %92 = vmatpush1.msra.mxu0 %v55
    %93 = vmatprep.subr.mxu0 0.0
    %94 = vmatpush1.msra.mxu0 %v56
    %95 = vmatprep.subr.mxu0 0.0
    %96 = vmatpush1.msra.mxu0 %v57
    %97 = vmatprep.subr.mxu0 0.0
    %98 = vmatpush1.msra.mxu0 0.0
    %99 = vmatprep.subr.mxu0 0.0
    %100 = vmatpush1.msra.mxu0 0.0
    %101 = vmatprep.subr.mxu0 0.0
    %102 = vmatpush1.msra.mxu0 0.0
    %103 = vmatprep.subr.mxu0 0.0
    %104 = vmatpush1.msra.mxu0 0.0
    %105 = vmatprep.subr.mxu0 0.0
    %106 = vmatpush1.msra.mxu0 0.0
    %107 = vmatprep.subr.mxu0 0.0
    %108 = vmatpush1.msra.mxu0 0.0
    %109 = vmatprep.subr.mxu0 0.0
    %110 = vmatpush1.msra.mxu0 0.0
    %111 = vmatprep.subr.mxu0 0.0
    %112 = vmatpush1.msra.mxu0 0.0
    %113 = vmatprep.subr.mxu0 0.0
    %114 = vmatpush1.msra.mxu0 0.0
    %115 = vmatprep.subr.mxu0 0.0
    %116 = vmatpush1.msra.mxu0 0.0
    %117 = vmatprep.subr.mxu0 0.0
    %118 = vmatpush1.msra.mxu0 0.0
    %119 = vmatprep.subr.mxu0 0.0
    %120 = vmatpush1.msra.mxu0 0.0
    %121 = vmatprep.subr.mxu0 0.0
    %122 = vmatpush1.msra.mxu0 0.0
    %123 = vmatprep.subr.mxu0 0.0
    %124 = vmatpush1.msra.mxu0 0.0
    %125 = vmatprep.subr.mxu0 0.0
    %126 = vmatpush1.msra.mxu0 0.0
    %127 = vmatprep.subr.mxu0 0.0
    %128 = vmatpush1.msra.mxu0 0.0
    %129 = vmatprep.mubr.f32.mxu0 0.0
    %130 = vmatmul.mubr.f32.gmra.mrb[0].mxu0 %v41
    %v131 = vpop.f32.mrb[0].mxu0
    %v132 = vadd.f32 %v63, %v131
    %v133 = vpop.f32.mrb[0].mxu0
    %134 = vdwg.mxu0
    %135 = vst [vmem:[#allocation7] sm:$0x3] %v132
    // Predicated region
    $region22: #{tpu_custom_call.1} parent=1 // pred_check
      _
    $region23: #{tpu_custom_call.1} parent=1 // pred_check_branch
      %137 = sbr.rel (0) target = $region25
    $region24: #{tpu_custom_call.1} parent=1 // pred_region
      %s139 = ssub.s32 32, 32
      %140 = vsyncadd [#allocation4], %s139
      %s142 = sshll.u32 [#allocation7], 4
      %s143 = int_to_ptr.vmem [resolvable:$true] %s142
      %145 = dma.vmem_to_hbm [thread:$0]  %s143, 32, %s3, [#allocation4]
    $region25: #{tpu_custom_call.1} parent=1 // pred_fallthru
      _
    // Predicated region
    $region26: #{tpu_custom_call.1} parent=1 // pred_check
      _
    $region27: #{tpu_custom_call.1} parent=1 // pred_check_branch
      %147 = sbr.rel (0) target = $region29
    $region28: #{tpu_custom_call.1} parent=1 // pred_region
      %148 = dma.done [#allocation4], 32
    $region29: #{tpu_custom_call.1} parent=1 // pred_fallthru
      _
    %149 = vsyncpa [#allocation3], 1
    %150 = vsyncpa [#allocation6], 1
    %151 = vsyncpa [#allocation4], 1

</llo_original>
